<compile_context>
chip_gen: v7x
topology: tpu7x:2x2x1
jax: 0.10.0
libtpu: 0.0.40
codegen_flags: <defaults>
</compile_context>

<pallas_src>
import math

import jax
import jax.numpy as jnp
from jax.experimental import pallas as pl
from jax.experimental.pallas import tpu as pltpu

_MiB = 1024 * 1024


def make_pe_table(d_model: int, max_len: int, dtype=jnp.float32):
    """Deterministic buffer construction, identical to the PyTorch __init__."""
    assert d_model % 2 == 0, "d_model must be even (same constraint as the PyTorch module)"
    position = jnp.arange(max_len, dtype=jnp.float32)[:, None]            # (max_len, 1)
    div_term = jnp.exp(
        jnp.arange(0, d_model, 2, dtype=jnp.float32) * (-math.log(10000.0) / d_model)
    )                                                                      # (d_model//2,)
    args = position * div_term                                             # (max_len, d_model//2)
    pe = jnp.zeros((max_len, d_model), jnp.float32)
    pe = pe.at[:, 0::2].set(jnp.sin(args))
    pe = pe.at[:, 1::2].set(jnp.cos(args))
    return pe.astype(dtype)                                                # (max_len, d_model)


def _tpu_budgets():
    """Per-generation tile budget, vmem_limit cap and megacore hint."""
    try:
        kind = jax.devices()[0].device_kind.lower()
    except Exception:  # pragma: no cover - defensive, e.g. no devices yet
        kind = ""
    if "v7" in kind:
        # 2 TensorCores per chip, only 64 MiB physical VMEM per TC -> keep headroom.
        return dict(per_tile=6 * _MiB, vmem_cap=48 * _MiB, min_batch_chunks=2)
    if "v6" in kind:
        # 32 MiB default scoped, 128 MiB physical.
        return dict(per_tile=6 * _MiB, vmem_cap=100 * _MiB, min_batch_chunks=1)
    if "v5" in kind:
        # 16 MiB default scoped, 128 MiB physical.
        return dict(per_tile=3 * _MiB, vmem_cap=100 * _MiB, min_batch_chunks=1)
    # Unknown generation: stay conservative.
    return dict(per_tile=3 * _MiB, vmem_cap=48 * _MiB, min_batch_chunks=1)


def _choose_tiles(B: int, N: int, L: int, itemsize: int,
                  per_tile_bytes: int, min_batch_chunks: int):
    """Pick (TB, TL): lane-dense, budget-sized, avoiding ragged time tiles."""
    row_bytes = N * itemsize
    # --- time tile: prefer the full (fully contiguous) time axis when it fits. ---
    if L <= 128 or L * row_bytes <= per_tile_bytes:
        tl = L
    else:
        lanes = max(1, per_tile_bytes // (row_bytes * 128)) * 128      # 128-aligned budget
        lanes = min(lanes, (L // 128) * 128)
        tl = lanes
        if L % 128 == 0:
            # Largest 128-multiple divisor of L within budget -> no ragged last tile.
            for cand in range(lanes, 0, -128):
                if L % cand == 0:
                    tl = cand
                    break
    # --- batch tile: fill the remaining budget. ---
    tb = max(1, per_tile_bytes // max(1, N * tl * itemsize))
    tb = min(tb, B)
    if min_batch_chunks > 1 and B >= min_batch_chunks:
        # v7x megacore: the batch axis is the only "parallel" axis (time is
        # "arbitrary" for the pe splat), so keep at least 2 batch chunks.
        tb = min(tb, -(-B // min_batch_chunks))
    return tb, tl


def _add_pe_kernel(x_ref, pe_ref, o_ref, pe_splat_ref):
    # x_ref / o_ref: (TB, N, TL) tile; pe_ref: lane-dense (TB, N) positional rows
    # for this batch chunk; pe_splat_ref: (TB, N, TL) VMEM scratch.
    @pl.when(pl.program_id(1) == 0)
    def _():
        # One lane->sublane relayout + lane splat per *batch chunk*, not per step.
        pe_splat_ref[...] = jnp.broadcast_to(pe_ref[...][:, :, None],
                                             pe_splat_ref.shape)

    # Per-step body: relayout-free VPU add, hidden under the streaming DMAs.
    o_ref[...] = x_ref[...] + pe_splat_ref[...]


def acanet_positional_encoding_1d(x, pe_table, *, block_batch=None, block_l=None,
                                  vmem_limit_bytes=None, donate_x=False):
    """out[b, n, l] = x[b, n, l] + pe_table[b, n].

    x: [B, N, L] (batch, filters == d_model, time); pe_table: [max_len, d_model].
    Note: donate_x only aliases inside pallas_call; donate x at the jax.jit
    level as well if you want XLA to reuse the buffer.
    """
    assert x.ndim == 3, "x must be [B, N, L]"
    B, N, L = x.shape
    assert pe_table.shape[1] == N, "number of filters must equal d_model"
    assert B <= pe_table.shape[0], "batch size must be <= max_len"
    itemsize = jnp.dtype(x.dtype).itemsize

    budgets = _tpu_budgets()
    tb_auto, tl_auto = _choose_tiles(B, N, L, itemsize,
                                     budgets["per_tile"], budgets["min_batch_chunks"])
    tb = min(block_batch, B) if block_batch is not None else tb_auto
    if block_l is None:
        tl = tl_auto
    elif block_l >= L:
        tl = L
    else:
        assert block_l % 128 == 0, "block_l must be a multiple of 128 (or >= L)"
        tl = block_l

    grid = (pl.cdiv(B, tb), pl.cdiv(L, tl))

    # Lane-dense positional slab, padded + reshaped to (B_chunks, TB, N) so every
    # grid step gets an exact (TB, N) block (no partial pe blocks, no in-kernel
    # dynamic slicing).  Tiny (B * N elems); re-DMA'd only when the batch chunk
    # changes (time axis is innermost and sequential).
    # NOTE: pe is cast to x.dtype before the add; for bf16/fp16 inputs this can
    # differ from PyTorch (fp32 buffer + promotion) by ~1 ulp of the narrow type.
    b_pad = grid[0] * tb
    pe_b = pe_table[:B].astype(x.dtype)
    if b_pad > B:
        pe_b = jnp.pad(pe_b, ((0, b_pad - B), (0, 0)))
    pe_b = pe_b.reshape(grid[0], tb, N)

    tile_bytes = tb * N * tl * itemsize
    if vmem_limit_bytes is None:
        # 2x in + 2x out (double-buffered) + 1x pe-splat scratch + pe block + headroom,
        # clamped to the per-generation cap (48 MiB on v7x's 64 MiB physical VMEM).
        need = 5 * tile_bytes + 2 * tb * N * itemsize + 2 * _MiB
        vmem_limit_bytes = int(min(budgets["vmem_cap"], max(need, 16 * _MiB)))

    cost = pl.CostEstimate(
        flops=B * N * L,
        transcendentals=0,
        bytes_accessed=2 * B * N * L * itemsize + b_pad * N * itemsize,
    )

    return pl.pallas_call(
        _add_pe_kernel,
        out_shape=jax.ShapeDtypeStruct((B, N, L), x.dtype),
        grid_spec=pltpu.PrefetchScalarGridSpec(
            num_scalar_prefetch=0,
            grid=grid,
            in_specs=[
                pl.BlockSpec((tb, N, tl), lambda bi, li: (bi, 0, li)),
                # First dim squeezed; block index only depends on bi -> fetched
                # once per batch chunk, resident across the inner time loop.
                pl.BlockSpec((None, tb, N), lambda bi, li: (bi, 0, 0)),
            ],
            out_specs=pl.BlockSpec((tb, N, tl), lambda bi, li: (bi, 0, li)),
            scratch_shapes=[pltpu.VMEM((tb, N, tl), x.dtype)],
        ),
        compiler_params=pltpu.CompilerParams(
            # Time axis must be "arbitrary": the pe splat is gated on time step 0
            # and pe-block residency relies on the time axis being innermost and
            # sequential.  Batch axis stays "parallel" (v7x megacore sharding).
            dimension_semantics=("parallel", "arbitrary"),
            vmem_limit_bytes=vmem_limit_bytes,
        ),
        cost_estimate=cost,
        input_output_aliases=({0: 0} if donate_x else {}),
    )(x, pe_b)


def _reference(x, pe_table):
    """Pure-JAX transcription of the exact PyTorch forward (with the permutes)."""
    B = x.shape[0]
    x_perm = jnp.transpose(x, (0, 2, 1))                     # [B, L, N]
    pe_buf = pe_table[:, None, :]                            # (max_len, 1, d_model)
    return jnp.transpose(x_perm + pe_buf[:B], (0, 2, 1))     # [B, N, L]


if __name__ == "__main__":
    key = jax.random.PRNGKey(0)
    k1, k2 = jax.random.split(key)

    # Case 1: time axis >= 128 (lane-dense tiles), automatic tile selection.
    B, N, L, max_len = 4, 64, 256, 16
    x1 = jax.random.normal(k1, (B, N, L), dtype=jnp.float32)
    pe1 = make_pe_table(N, max_len)
    out1 = jax.block_until_ready(acanet_positional_encoding_1d(x1, pe1))
    assert out1.shape == (B, N, L) and out1.dtype == x1.dtype
    assert jnp.allclose(out1, _reference(x1, pe1), atol=1e-6), "case 1 mismatch"

    # Case 2: forced 2x2 grid (multi-step time loop -> exercises the once-per-
    # batch-chunk pe splat under pl.when and the "arbitrary" time axis).
    out2 = jax.block_until_ready(
        acanet_positional_encoding_1d(x1, pe1, block_batch=2, block_l=128))
    assert jnp.allclose(out2, _reference(x1, pe1), atol=1e-6), "case 2 mismatch"

    # Case 3: short time axis + partial last batch block (masking / pe padding).
    B, N, L, max_len = 3, 32, 40, 8
    x3 = jax.random.normal(k2, (B, N, L), dtype=jnp.float32)
    pe3 = make_pe_table(N, max_len)
    out3 = jax.block_until_ready(
        acanet_positional_encoding_1d(x3, pe3, block_batch=2))
    assert out3.shape == (B, N, L)
    assert jnp.allclose(out3, _reference(x3, pe3), atol=1e-6), "case 3 mismatch"

    # TODO(synk): the order-of-magnitude win is fusing this 1-flop/element
    # broadcast-add into the producer/consumer kernel (conv/matmul epilogue)
    # instead of paying a standalone HBM read+write of x.
    print("KERNEL_OK")
</pallas_src>

<mosaic_0001>
module attributes {stable_mosaic.version = 11 : i64} {
  func.func @_add_pe_kernel(%arg0: i32, %arg1: i32, %arg2: memref<4x64x256xf32, #tpu.memory_space<vmem>>, %arg3: memref<1x4x64xf32, #tpu.memory_space<vmem>>, %arg4: memref<4x64x256xf32, #tpu.memory_space<vmem>>, %arg5: memref<4x64x256xf32, #tpu.memory_space<vmem>>) attributes {dimension_semantics = [#tpu.dimension_semantics<parallel>, #tpu.dimension_semantics<arbitrary>], iteration_bounds = array<i64: 1, 1>, scalar_prefetch = 0 : i64, scratch_operands = 1 : i64, tpu.core_type = #tpu.core_type<tc>, window_params = [{transform_indices = @transform_0, window_bounds = array<i64: 4, 64, 256>}, {transform_indices = @transform_1, window_bounds = array<i64: 1, 4, 64>}, {transform_indices = @transform_2, window_bounds = array<i64: 4, 64, 256>}]} {
    %c0_i32 = arith.constant 0 : i32
    %0 = arith.cmpi eq, %arg1, %c0_i32 : i32
    %1 = arith.extui %0 : i1 to i32
    %c0_i32_0 = arith.constant 0 : i32
    %2 = arith.cmpi ne, %1, %c0_i32_0 : i32
    scf.if %2 {
      %c0_9 = arith.constant 0 : index
      %c0_10 = arith.constant 0 : index
      %c0_11 = arith.constant 0 : index
      %7 = vector.load %arg3[%c0_9, %c0_10, %c0_11] : memref<1x4x64xf32, #tpu.memory_space<vmem>>, vector<1x4x64xf32>
      %8 = vector.shape_cast %7 : vector<1x4x64xf32> to vector<4x64xf32>
      %9 = vector.shape_cast %8 : vector<4x64xf32> to vector<4x64x1xf32>
      %10 = vector.shape_cast %9 : vector<4x64x1xf32> to vector<4x64x1xf32>
      %11 = vector.broadcast %10 : vector<4x64x1xf32> to vector<4x64x256xf32>
      %c0_12 = arith.constant 0 : index
      %c0_13 = arith.constant 0 : index
      %c0_14 = arith.constant 0 : index
      %12 = vector.load %arg5[%c0_12, %c0_13, %c0_14] : memref<4x64x256xf32, #tpu.memory_space<vmem>>, vector<4x64x256xf32>
      tpu.vector_store %arg5[%c0_12, %c0_13, %c0_14], %11 {strides = array<i32>} : memref<4x64x256xf32, #tpu.memory_space<vmem>>, vector<4x64x256xf32>,
    } else {
    }
    %c0 = arith.constant 0 : index
    %c0_1 = arith.constant 0 : index
    %c0_2 = arith.constant 0 : index
    %3 = vector.load %arg2[%c0, %c0_1, %c0_2] : memref<4x64x256xf32, #tpu.memory_space<vmem>>, vector<4x64x256xf32>
    %c0_3 = arith.constant 0 : index
    %c0_4 = arith.constant 0 : index
    %c0_5 = arith.constant 0 : index
    %4 = vector.load %arg5[%c0_3, %c0_4, %c0_5] : memref<4x64x256xf32, #tpu.memory_space<vmem>>, vector<4x64x256xf32>
    %5 = arith.addf %3, %4 : vector<4x64x256xf32>
    %c0_6 = arith.constant 0 : index
    %c0_7 = arith.constant 0 : index
    %c0_8 = arith.constant 0 : index
    %6 = vector.load %arg4[%c0_6, %c0_7, %c0_8] : memref<4x64x256xf32, #tpu.memory_space<vmem>>, vector<4x64x256xf32>
    tpu.vector_store %arg4[%c0_6, %c0_7, %c0_8], %5 {strides = array<i32>} : memref<4x64x256xf32, #tpu.memory_space<vmem>>, vector<4x64x256xf32>,
    return
  }
  func.func @transform_0(%arg0: i32, %arg1: i32) -> (i32, i32, i32) {
    %c0_i32 = arith.constant 0 : i32
    %c0_i32_0 = arith.constant 0 : i32
    return %arg0, %c0_i32, %arg1 : i32, i32, i32
  }
  func.func @transform_1(%arg0: i32, %arg1: i32) -> (i32, i32, i32) {
    %c0_i32 = arith.constant 0 : i32
    %c0_i32_0 = arith.constant 0 : i32
    %c0_i32_1 = arith.constant 0 : i32
    return %arg0, %c0_i32, %c0_i32_0 : i32, i32, i32
  }
  func.func @transform_2(%arg0: i32, %arg1: i32) -> (i32, i32, i32) {
    %c0_i32 = arith.constant 0 : i32
    %c0_i32_0 = arith.constant 0 : i32
    return %arg0, %c0_i32, %arg1 : i32, i32, i32
  }
}

</mosaic_0001>

<llo_original>
// kernel: tpu_custom_call.1
$region0: #{tpu_custom_call.1}
  #allocation0 [shape = 'u32[]', space=smem, size = 0x4, offset = 0x4, fixed_abs, tag = 'smem constant byte address 0x4 - core index']
  #allocation1 [shape = 'u32[144,128]{1,0:T(1,128)}', space=vmem, size = 0x12000, scoped, tag = 'internal scratch']
  #allocation2 [shape = 'f32[4,64,256]{2,1,0:T(8,128)}', space=vmem, size = 0x40000, scoped, tag = 'scratch operand']
  %s0 = inlined_call_operand.hbm [shape: f32[4,64,256], index: 0, kind: input, shape index: {}]
  %s1 = inlined_call_operand.hbm [shape: f32[1,4,64], index: 1, kind: input, shape index: {}]
  %s2 = inlined_call_operand.hbm [shape: f32[4,64,256], index: 2, kind: output, shape index: {}]
  %s3 = sld [smem:[#allocation0]]
  $region30: #{tpu_custom_call.1} parent=0
    _
  %s5 = ssub.s32 1, %s3
  %s6 = scalar_select 0, %s5, %s3
  $region1: #{tpu_custom_call.1} parent=0
    #allocation3 [shape = 'u8[262144]{0}', space=vmem, size = 0x40000, scoped, tag = 'input window, operand 0, single buffered']
    #allocation4 [shape = 's32[1]{0}', space=sflag, size = 0x4, scoped, tag = 'scoped memory for tpu_custom_call.1']
    #allocation5 [shape = 's32[1]{0}', space=sflag, size = 0x4, scoped, tag = 'scoped memory for tpu_custom_call.1']
    #allocation6 [shape = 'u8[2048]{0}', space=vmem, size = 0x800, scoped, tag = 'input window, operand 1, single buffered']
    #allocation7 [shape = 's32[1]{0}', space=sflag, size = 0x4, scoped, tag = 'scoped memory for tpu_custom_call.1']
    #allocation8 [shape = 'u8[262144]{0}', space=vmem, size = 0x40000, scoped, tag = 'output window, operand 0, single buffered']
    %7 = vsyncpa [#allocation4], 0
    %8 = vsyncpa [#allocation7], 0
    %9 = vsyncpa [#allocation5], 0
    // Predicated region
    $region2: #{tpu_custom_call.1} parent=1 // pred_check
      _
    $region3: #{tpu_custom_call.1} parent=1 // pred_check_branch
      %11 = sbr.rel (0) target = $region5
    $region4: #{tpu_custom_call.1} parent=1 // pred_region
      %s13 = ssub.s32 8192, 8192
      %14 = vsyncadd [#allocation4], %s13
      %s15 = sshll.u32 [#allocation3], 4
      %s16 = int_to_ptr.vmem [resolvable:$true] %s15
      %21 = dma.hbm_to_vmem [thread:$0]  %s0, 8192, %s16, [#allocation4], 256, 256, 16
    $region5: #{tpu_custom_call.1} parent=1 // pred_fallthru
      _
    // Predicated region
    $region6: #{tpu_custom_call.1} parent=1 // pred_check
      _
    $region7: #{tpu_custom_call.1} parent=1 // pred_check_branch
      %23 = sbr.rel (0) target = $region9
    $region8: #{tpu_custom_call.1} parent=1 // pred_region
      %s25 = ssub.s32 64, 64
      %26 = vsyncadd [#allocation7], %s25
      %s28 = sshll.u32 [#allocation6], 4
      %s29 = int_to_ptr.vmem [resolvable:$true] %s28
      %31 = dma.hbm_to_vmem [thread:$0]  %s1, 64, %s29, [#allocation7]
    $region9: #{tpu_custom_call.1} parent=1 // pred_fallthru
      _
    // Predicated region
    $region10: #{tpu_custom_call.1} parent=1 // pred_check
      _
    $region11: #{tpu_custom_call.1} parent=1 // pred_check_branch
      %33 = sbr.rel (0) target = $region13
    $region12: #{tpu_custom_call.1} parent=1 // pred_region
      %34 = dma.done [#allocation4], 8192
    $region13: #{tpu_custom_call.1} parent=1 // pred_fallthru
      _
    // Predicated region
    $region14: #{tpu_custom_call.1} parent=1 // pred_check
      _
    $region15: #{tpu_custom_call.1} parent=1 // pred_check_branch
      %36 = sbr.rel (0) target = $region17
    $region16: #{tpu_custom_call.1} parent=1 // pred_region
      %37 = dma.done [#allocation7], 64
    $region17: #{tpu_custom_call.1} parent=1 // pred_fallthru
      _
    %p38 = scmp.eq.s32.totalorder 0, 0
    // Predicated region
    $region18: #{tpu_custom_call.1} parent=1 // pred_check
      %p39 = pneg %p38
    $region19: #{tpu_custom_call.1} parent=1 // pred_check_branch
      %41 = sbr.rel (%p39) target = $region21
    $region20: #{tpu_custom_call.1} parent=1 // pred_region
      %v42 = vld [vmem:[#allocation6] sm:$0xf]
      %v43 = vlaneseq
      %v44 = vshrl.u32 %v43, 7
      %v45 = vsub.s32 0, %v44
      %v46 = vrot.slane %v42, %v45
      %48 = vbcast.lane.b32.xlu0 %v46, 256
      %v49 = vpop.permute.xlu0 %48
      %s51 = sor.u32 256, 8
      %52 = vbcast.lane.b32.xlu0 %v46, %s51
      %v53 = vpop.permute.xlu0 %52
      %s55 = sor.u32 256, 16
      %56 = vbcast.lane.b32.xlu0 %v46, %s55
      %v57 = vpop.permute.xlu0 %56
      %s59 = sor.u32 256, 24
      %60 = vbcast.lane.b32.xlu0 %v46, %s59
      %v61 = vpop.permute.xlu0 %60
      %s63 = sor.u32 256, 32
      %64 = vbcast.lane.b32.xlu0 %v46, %s63
      %v65 = vpop.permute.xlu0 %64
      %s67 = sor.u32 256, 40
      %68 = vbcast.lane.b32.xlu0 %v46, %s67
      %v69 = vpop.permute.xlu0 %68
      %s71 = sor.u32 256, 48
      %72 = vbcast.lane.b32.xlu0 %v46, %s71
      %v73 = vpop.permute.xlu0 %72
      %s75 = sor.u32 256, 56
      %76 = vbcast.lane.b32.xlu0 %v46, %s75
      %v77 = vpop.permute.xlu0 %76
      %v78 = vlaneseq
      %v79 = vshrl.u32 %v78, 7
      %v80 = vsub.s32 1, %v79
      %v81 = vrot.slane %v42, %v80
      %83 = vbcast.lane.b32.xlu0 %v81, 256
      %v84 = vpop.permute.xlu0 %83
      %s86 = sor.u32 256, 8
      %87 = vbcast.lane.b32.xlu0 %v81, %s86
      %v88 = vpop.permute.xlu0 %87
      %s90 = sor.u32 256, 16
      %91 = vbcast.lane.b32.xlu0 %v81, %s90
      %v92 = vpop.permute.xlu0 %91
      %s94 = sor.u32 256, 24
      %95 = vbcast.lane.b32.xlu0 %v81, %s94
      %v96 = vpop.permute.xlu0 %95
      %s98 = sor.u32 256, 32
      %99 = vbcast.lane.b32.xlu0 %v81, %s98
      %v100 = vpop.permute.xlu0 %99
      %s102 = sor.u32 256, 40
      %103 = vbcast.lane.b32.xlu0 %v81, %s102
      %v104 = vpop.permute.xlu0 %103
      %s106 = sor.u32 256, 48
      %107 = vbcast.lane.b32.xlu0 %v81, %s106
      %v108 = vpop.permute.xlu0 %107
      %s110 = sor.u32 256, 56
      %111 = vbcast.lane.b32.xlu0 %v81, %s110
      %v112 = vpop.permute.xlu0 %111
      %v113 = vlaneseq
      %v114 = vshrl.u32 %v113, 7
      %v115 = vsub.s32 2, %v114
      %v116 = vrot.slane %v42, %v115
      %118 = vbcast.lane.b32.xlu0 %v116, 256
      %v119 = vpop.permute.xlu0 %118
      %s121 = sor.u32 256, 8
      %122 = vbcast.lane.b32.xlu0 %v116, %s121
      %v123 = vpop.permute.xlu0 %122
      %s125 = sor.u32 256, 16
      %126 = vbcast.lane.b32.xlu0 %v116, %s125
      %v127 = vpop.permute.xlu0 %126
      %s129 = sor.u32 256, 24
      %130 = vbcast.lane.b32.xlu0 %v116, %s129
      %v131 = vpop.permute.xlu0 %130
      %s133 = sor.u32 256, 32
      %134 = vbcast.lane.b32.xlu0 %v116, %s133
      %v135 = vpop.permute.xlu0 %134
      %s137 = sor.u32 256, 40
      %138 = vbcast.lane.b32.xlu0 %v116, %s137
      %v139 = vpop.permute.xlu0 %138
      %s141 = sor.u32 256, 48
      %142 = vbcast.lane.b32.xlu0 %v116, %s141
      %v143 = vpop.permute.xlu0 %142
      %s145 = sor.u32 256, 56
      %146 = vbcast.lane.b32.xlu0 %v116, %s145
      %v147 = vpop.permute.xlu0 %146
      %v148 = vlaneseq
      %v149 = vshrl.u32 %v148, 7
      %v150 = vsub.s32 3, %v149
      %v151 = vrot.slane %v42, %v150
      %153 = vbcast.lane.b32.xlu0 %v151, 256
      %v154 = vpop.permute.xlu0 %153
      %s156 = sor.u32 256, 8
      %157 = vbcast.lane.b32.xlu0 %v151, %s156
      %v158 = vpop.permute.xlu0 %157
      %s160 = sor.u32 256, 16
      %161 = vbcast.lane.b32.xlu0 %v151, %s160
      %v162 = vpop.permute.xlu0 %161
      %s164 = sor.u32 256, 24
      %165 = vbcast.lane.b32.xlu0 %v151, %s164
      %v166 = vpop.permute.xlu0 %165
      %s168 = sor.u32 256, 32
      %169 = vbcast.lane.b32.xlu0 %v151, %s168
      %v170 = vpop.permute.xlu0 %169
      %s172 = sor.u32 256, 40
      %173 = vbcast.lane.b32.xlu0 %v151, %s172
      %v174 = vpop.permute.xlu0 %173
      %s176 = sor.u32 256, 48
      %177 = vbcast.lane.b32.xlu0 %v151, %s176
      %v178 = vpop.permute.xlu0 %177
      %s180 = sor.u32 256, 56
      %181 = vbcast.lane.b32.xlu0 %v151, %s180
      %v182 = vpop.permute.xlu0 %181
      %183 = vst [vmem:[#allocation2] sm:$0xff] %v49
      %184 = vst [vmem:[#allocation2 + $0x8] sm:$0xff] %v49
      %185 = vst [vmem:[#allocation2 + $0x10] sm:$0xff] %v53
      %186 = vst [vmem:[#allocation2 + $0x18] sm:$0xff] %v53
      %187 = vst [vmem:[#allocation2 + $0x20] sm:$0xff] %v57
      %188 = vst [vmem:[#allocation2 + $0x28] sm:$0xff] %v57
      %189 = vst [vmem:[#allocation2 + $0x30] sm:$0xff] %v61
      %190 = vst [vmem:[#allocation2 + $0x38] sm:$0xff] %v61
      %191 = vst [vmem:[#allocation2 + $0x40] sm:$0xff] %v65
      %192 = vst [vmem:[#allocation2 + $0x48] sm:$0xff] %v65
      %193 = vst [vmem:[#allocation2 + $0x50] sm:$0xff] %v69
      %194 = vst [vmem:[#allocation2 + $0x58] sm:$0xff] %v69
      %195 = vst [vmem:[#allocation2 + $0x60] sm:$0xff] %v73
      %196 = vst [vmem:[#allocation2 + $0x68] sm:$0xff] %v73
      %197 = vst [vmem:[#allocation2 + $0x70] sm:$0xff] %v77
      %198 = vst [vmem:[#allocation2 + $0x78] sm:$0xff] %v77
      %199 = vst [vmem:[#allocation2 + $0x80] sm:$0xff] %v84
      %200 = vst [vmem:[#allocation2 + $0x88] sm:$0xff] %v84
      %201 = vst [vmem:[#allocation2 + $0x90] sm:$0xff] %v88
      %202 = vst [vmem:[#allocation2 + $0x98] sm:$0xff] %v88
      %203 = vst [vmem:[#allocation2 + $0xa0] sm:$0xff] %v92
      %204 = vst [vmem:[#allocation2 + $0xa8] sm:$0xff] %v92
      %205 = vst [vmem:[#allocation2 + $0xb0] sm:$0xff] %v96
      %206 = vst [vmem:[#allocation2 + $0xb8] sm:$0xff] %v96
      %207 = vst [vmem:[#allocation2 + $0xc0] sm:$0xff] %v100
      %208 = vst [vmem:[#allocation2 + $0xc8] sm:$0xff] %v100
      %209 = vst [vmem:[#allocation2 + $0xd0] sm:$0xff] %v104
      %210 = vst [vmem:[#allocation2 + $0xd8] sm:$0xff] %v104
      %211 = vst [vmem:[#allocation2 + $0xe0] sm:$0xff] %v108
      %212 = vst [vmem:[#allocation2 + $0xe8] sm:$0xff] %v108
      %213 = vst [vmem:[#allocation2 + $0xf0] sm:$0xff] %v112
      %214 = vst [vmem:[#allocation2 + $0xf8] sm:$0xff] %v112
      %215 = vst [vmem:[#allocation2 + $0x100] sm:$0xff] %v119
      %216 = vst [vmem:[#allocation2 + $0x108] sm:$0xff] %v119
      %217 = vst [vmem:[#allocation2 + $0x110] sm:$0xff] %v123
      %218 = vst [vmem:[#allocation2 + $0x118] sm:$0xff] %v123
      %219 = vst [vmem:[#allocation2 + $0x120] sm:$0xff] %v127
      %220 = vst [vmem:[#allocation2 + $0x128] sm:$0xff] %v127
      %221 = vst [vmem:[#allocation2 + $0x130] sm:$0xff] %v131
      %222 = vst [vmem:[#allocation2 + $0x138] sm:$0xff] %v131
      %223 = vst [vmem:[#allocation2 + $0x140] sm:$0xff] %v135
      %224 = vst [vmem:[#allocation2 + $0x148] sm:$0xff] %v135
      %225 = vst [vmem:[#allocation2 + $0x150] sm:$0xff] %v139
      %226 = vst [vmem:[#allocation2 + $0x158] sm:$0xff] %v139
      %227 = vst [vmem:[#allocation2 + $0x160] sm:$0xff] %v143
      %228 = vst [vmem:[#allocation2 + $0x168] sm:$0xff] %v143
      %229 = vst [vmem:[#allocation2 + $0x170] sm:$0xff] %v147
      %230 = vst [vmem:[#allocation2 + $0x178] sm:$0xff] %v147
      %231 = vst [vmem:[#allocation2 + $0x180] sm:$0xff] %v154
      %232 = vst [vmem:[#allocation2 + $0x188] sm:$0xff] %v154
      %233 = vst [vmem:[#allocation2 + $0x190] sm:$0xff] %v158
      %234 = vst [vmem:[#allocation2 + $0x198] sm:$0xff] %v158
      %235 = vst [vmem:[#allocation2 + $0x1a0] sm:$0xff] %v162
      %236 = vst [vmem:[#allocation2 + $0x1a8] sm:$0xff] %v162
      %237 = vst [vmem:[#allocation2 + $0x1b0] sm:$0xff] %v166
      %238 = vst [vmem:[#allocation2 + $0x1b8] sm:$0xff] %v166
      %239 = vst [vmem:[#allocation2 + $0x1c0] sm:$0xff] %v170
      %240 = vst [vmem:[#allocation2 + $0x1c8] sm:$0xff] %v170
      %241 = vst [vmem:[#allocation2 + $0x1d0] sm:$0xff] %v174
      %242 = vst [vmem:[#allocation2 + $0x1d8] sm:$0xff] %v174
      %243 = vst [vmem:[#allocation2 + $0x1e0] sm:$0xff] %v178
      %244 = vst [vmem:[#allocation2 + $0x1e8] sm:$0xff] %v178
      %245 = vst [vmem:[#allocation2 + $0x1f0] sm:$0xff] %v182
      %246 = vst [vmem:[#allocation2 + $0x1f8] sm:$0xff] %v182
    $region21: #{tpu_custom_call.1} parent=1 // pred_fallthru
      _
    %v247 = vld [vmem:[#allocation3] sm:$0xff]
    %v248 = vld [vmem:[#allocation3 + $0x8] sm:$0xff]
    %v249 = vld [vmem:[#allocation3 + $0x10] sm:$0xff]
    %v250 = vld [vmem:[#allocation3 + $0x18] sm:$0xff]
    %v251 = vld [vmem:[#allocation3 + $0x20] sm:$0xff]
    %v252 = vld [vmem:[#allocation3 + $0x28] sm:$0xff]
    %v253 = vld [vmem:[#allocation3 + $0x30] sm:$0xff]
    %v254 = vld [vmem:[#allocation3 + $0x38] sm:$0xff]
    %v255 = vld [vmem:[#allocation3 + $0x40] sm:$0xff]
    %v256 = vld [vmem:[#allocation3 + $0x48] sm:$0xff]
    %v257 = vld [vmem:[#allocation3 + $0x50] sm:$0xff]
    %v258 = vld [vmem:[#allocation3 + $0x58] sm:$0xff]
    %v259 = vld [vmem:[#allocation3 + $0x60] sm:$0xff]
    %v260 = vld [vmem:[#allocation3 + $0x68] sm:$0xff]
    %v261 = vld [vmem:[#allocation3 + $0x70] sm:$0xff]
    %v262 = vld [vmem:[#allocation3 + $0x78] sm:$0xff]
    %v263 = vld [vmem:[#allocation3 + $0x80] sm:$0xff]
    %v264 = vld [vmem:[#allocation3 + $0x88] sm:$0xff]
    %v265 = vld [vmem:[#allocation3 + $0x90] sm:$0xff]
    %v266 = vld [vmem:[#allocation3 + $0x98] sm:$0xff]
    %v267 = vld [vmem:[#allocation3 + $0xa0] sm:$0xff]
    %v268 = vld [vmem:[#allocation3 + $0xa8] sm:$0xff]
    %v269 = vld [vmem:[#allocation3 + $0xb0] sm:$0xff]
    %v270 = vld [vmem:[#allocation3 + $0xb8] sm:$0xff]
    %v271 = vld [vmem:[#allocation3 + $0xc0] sm:$0xff]
    %v272 = vld [vmem:[#allocation3 + $0xc8] sm:$0xff]
    %v273 = vld [vmem:[#allocation3 + $0xd0] sm:$0xff]
    %v274 = vld [vmem:[#allocation3 + $0xd8] sm:$0xff]
    %v275 = vld [vmem:[#allocation3 + $0xe0] sm:$0xff]
    %v276 = vld [vmem:[#allocation3 + $0xe8] sm:$0xff]
    %v277 = vld [vmem:[#allocation3 + $0xf0] sm:$0xff]
    %v278 = vld [vmem:[#allocation3 + $0xf8] sm:$0xff]
    %v279 = vld [vmem:[#allocation3 + $0x100] sm:$0xff]
    %v280 = vld [vmem:[#allocation3 + $0x108] sm:$0xff]
    %v281 = vld [vmem:[#allocation3 + $0x110] sm:$0xff]
    %v282 = vld [vmem:[#allocation3 + $0x118] sm:$0xff]
    %v283 = vld [vmem:[#allocation3 + $0x120] sm:$0xff]
    %v284 = vld [vmem:[#allocation3 + $0x128] sm:$0xff]
    %v285 = vld [vmem:[#allocation3 + $0x130] sm:$0xff]
    %v286 = vld [vmem:[#allocation3 + $0x138] sm:$0xff]
    %v287 = vld [vmem:[#allocation3 + $0x140] sm:$0xff]
    %v288 = vld [vmem:[#allocation3 + $0x148] sm:$0xff]
    %v289 = vld [vmem:[#allocation3 + $0x150] sm:$0xff]
    %v290 = vld [vmem:[#allocation3 + $0x158] sm:$0xff]
    %v291 = vld [vmem:[#allocation3 + $0x160] sm:$0xff]
    %v292 = vld [vmem:[#allocation3 + $0x168] sm:$0xff]
    %v293 = vld [vmem:[#allocation3 + $0x170] sm:$0xff]
    %v294 = vld [vmem:[#allocation3 + $0x178] sm:$0xff]
    %v295 = vld [vmem:[#allocation3 + $0x180] sm:$0xff]
    %v296 = vld [vmem:[#allocation3 + $0x188] sm:$0xff]
    %v297 = vld [vmem:[#allocation3 + $0x190] sm:$0xff]
    %v298 = vld [vmem:[#allocation3 + $0x198] sm:$0xff]
    %v299 = vld [vmem:[#allocation3 + $0x1a0] sm:$0xff]
    %v300 = vld [vmem:[#allocation3 + $0x1a8] sm:$0xff]
    %v301 = vld [vmem:[#allocation3 + $0x1b0] sm:$0xff]
    %v302 = vld [vmem:[#allocation3 + $0x1b8] sm:$0xff]
    %v303 = vld [vmem:[#allocation3 + $0x1c0] sm:$0xff]
    %v304 = vld [vmem:[#allocation3 + $0x1c8] sm:$0xff]
    %v305 = vld [vmem:[#allocation3 + $0x1d0] sm:$0xff]
    %v306 = vld [vmem:[#allocation3 + $0x1d8] sm:$0xff]
    %v307 = vld [vmem:[#allocation3 + $0x1e0] sm:$0xff]
    %v308 = vld [vmem:[#allocation3 + $0x1e8] sm:$0xff]
    %v309 = vld [vmem:[#allocation3 + $0x1f0] sm:$0xff]
    %v310 = vld [vmem:[#allocation3 + $0x1f8] sm:$0xff]
    %v311 = vld [vmem:[#allocation2] sm:$0xff]
    %v312 = vld [vmem:[#allocation2 + $0x8] sm:$0xff]
    %v313 = vld [vmem:[#allocation2 + $0x10] sm:$0xff]
    %v314 = vld [vmem:[#allocation2 + $0x18] sm:$0xff]
    %v315 = vld [vmem:[#allocation2 + $0x20] sm:$0xff]
    %v316 = vld [vmem:[#allocation2 + $0x28] sm:$0xff]
    %v317 = vld [vmem:[#allocation2 + $0x30] sm:$0xff]
    %v318 = vld [vmem:[#allocation2 + $0x38] sm:$0xff]
    %v319 = vld [vmem:[#allocation2 + $0x40] sm:$0xff]
    %v320 = vld [vmem:[#allocation2 + $0x48] sm:$0xff]
    %v321 = vld [vmem:[#allocation2 + $0x50] sm:$0xff]
    %v322 = vld [vmem:[#allocation2 + $0x58] sm:$0xff]
    %v323 = vld [vmem:[#allocation2 + $0x60] sm:$0xff]
    %v324 = vld [vmem:[#allocation2 + $0x68] sm:$0xff]
    %v325 = vld [vmem:[#allocation2 + $0x70] sm:$0xff]
    %v326 = vld [vmem:[#allocation2 + $0x78] sm:$0xff]
    %v327 = vld [vmem:[#allocation2 + $0x80] sm:$0xff]
    %v328 = vld [vmem:[#allocation2 + $0x88] sm:$0xff]
    %v329 = vld [vmem:[#allocation2 + $0x90] sm:$0xff]
    %v330 = vld [vmem:[#allocation2 + $0x98] sm:$0xff]
    %v331 = vld [vmem:[#allocation2 + $0xa0] sm:$0xff]
    %v332 = vld [vmem:[#allocation2 + $0xa8] sm:$0xff]
    %v333 = vld [vmem:[#allocation2 + $0xb0] sm:$0xff]
    %v334 = vld [vmem:[#allocation2 + $0xb8] sm:$0xff]
    %v335 = vld [vmem:[#allocation2 + $0xc0] sm:$0xff]
    %v336 = vld [vmem:[#allocation2 + $0xc8] sm:$0xff]
    %v337 = vld [vmem:[#allocation2 + $0xd0] sm:$0xff]
    %v338 = vld [vmem:[#allocation2 + $0xd8] sm:$0xff]
    %v339 = vld [vmem:[#allocation2 + $0xe0] sm:$0xff]
    %v340 = vld [vmem:[#allocation2 + $0xe8] sm:$0xff]
    %v341 = vld [vmem:[#allocation2 + $0xf0] sm:$0xff]
    %v342 = vld [vmem:[#allocation2 + $0xf8] sm:$0xff]
    %v343 = vld [vmem:[#allocation2 + $0x100] sm:$0xff]
    %v344 = vld [vmem:[#allocation2 + $0x108] sm:$0xff]
    %v345 = vld [vmem:[#allocation2 + $0x110] sm:$0xff]
    %v346 = vld [vmem:[#allocation2 + $0x118] sm:$0xff]
    %v347 = vld [vmem:[#allocation2 + $0x120] sm:$0xff]
    %v348 = vld [vmem:[#allocation2 + $0x128] sm:$0xff]
    %v349 = vld [vmem:[#allocation2 + $0x130] sm:$0xff]
    %v350 = vld [vmem:[#allocation2 + $0x138] sm:$0xff]
    %v351 = vld [vmem:[#allocation2 + $0x140] sm:$0xff]
    %v352 = vld [vmem:[#allocation2 + $0x148] sm:$0xff]
    %v353 = vld [vmem:[#allocation2 + $0x150] sm:$0xff]
    %v354 = vld [vmem:[#allocation2 + $0x158] sm:$0xff]
    %v355 = vld [vmem:[#allocation2 + $0x160] sm:$0xff]
    %v356 = vld [vmem:[#allocation2 + $0x168] sm:$0xff]
    %v357 = vld [vmem:[#allocation2 + $0x170] sm:$0xff]
    %v358 = vld [vmem:[#allocation2 + $0x178] sm:$0xff]
    %v359 = vld [vmem:[#allocation2 + $0x180] sm:$0xff]
    %v360 = vld [vmem:[#allocation2 + $0x188] sm:$0xff]
    %v361 = vld [vmem:[#allocation2 + $0x190] sm:$0xff]
    %v362 = vld [vmem:[#allocation2 + $0x198] sm:$0xff]
    %v363 = vld [vmem:[#allocation2 + $0x1a0] sm:$0xff]
    %v364 = vld [vmem:[#allocation2 + $0x1a8] sm:$0xff]
    %v365 = vld [vmem:[#allocation2 + $0x1b0] sm:$0xff]
    %v366 = vld [vmem:[#allocation2 + $0x1b8] sm:$0xff]
    %v367 = vld [vmem:[#allocation2 + $0x1c0] sm:$0xff]
    %v368 = vld [vmem:[#allocation2 + $0x1c8] sm:$0xff]
    %v369 = vld [vmem:[#allocation2 + $0x1d0] sm:$0xff]
    %v370 = vld [vmem:[#allocation2 + $0x1d8] sm:$0xff]
    %v371 = vld [vmem:[#allocation2 + $0x1e0] sm:$0xff]
    %v372 = vld [vmem:[#allocation2 + $0x1e8] sm:$0xff]
    %v373 = vld [vmem:[#allocation2 + $0x1f0] sm:$0xff]
    %v374 = vld [vmem:[#allocation2 + $0x1f8] sm:$0xff]
    %v375 = vadd.f32 %v247, %v311
    %v376 = vadd.f32 %v248, %v312
    %v377 = vadd.f32 %v249, %v313
    %v378 = vadd.f32 %v250, %v314
    %v379 = vadd.f32 %v251, %v315
    %v380 = vadd.f32 %v252, %v316
    %v381 = vadd.f32 %v253, %v317
    %v382 = vadd.f32 %v254, %v318
    %v383 = vadd.f32 %v255, %v319
    %v384 = vadd.f32 %v256, %v320
    %v385 = vadd.f32 %v257, %v321
    %v386 = vadd.f32 %v258, %v322
    %v387 = vadd.f32 %v259, %v323
    %v388 = vadd.f32 %v260, %v324
    %v389 = vadd.f32 %v261, %v325
    %v390 = vadd.f32 %v262, %v326
    %v391 = vadd.f32 %v263, %v327
    %v392 = vadd.f32 %v264, %v328
    %v393 = vadd.f32 %v265, %v329
    %v394 = vadd.f32 %v266, %v330
    %v395 = vadd.f32 %v267, %v331
    %v396 = vadd.f32 %v268, %v332
    %v397 = vadd.f32 %v269, %v333
    %v398 = vadd.f32 %v270, %v334
    %v399 = vadd.f32 %v271, %v335
    %v400 = vadd.f32 %v272, %v336
    %v401 = vadd.f32 %v273, %v337
    %v402 = vadd.f32 %v274, %v338
    %v403 = vadd.f32 %v275, %v339
    %v404 = vadd.f32 %v276, %v340
    %v405 = vadd.f32 %v277, %v341
    %v406 = vadd.f32 %v278, %v342
    %v407 = vadd.f32 %v279, %v343
    %v408 = vadd.f32 %v280, %v344
    %v409 = vadd.f32 %v281, %v345
    %v410 = vadd.f32 %v282, %v346
    %v411 = vadd.f32 %v283, %v347
    %v412 = vadd.f32 %v284, %v348
    %v413 = vadd.f32 %v285, %v349
    %v414 = vadd.f32 %v286, %v350
    %v415 = vadd.f32 %v287, %v351
    %v416 = vadd.f32 %v288, %v352
    %v417 = vadd.f32 %v289, %v353
    %v418 = vadd.f32 %v290, %v354
    %v419 = vadd.f32 %v291, %v355
    %v420 = vadd.f32 %v292, %v356
    %v421 = vadd.f32 %v293, %v357
    %v422 = vadd.f32 %v294, %v358
    %v423 = vadd.f32 %v295, %v359
    %v424 = vadd.f32 %v296, %v360
    %v425 = vadd.f32 %v297, %v361
    %v426 = vadd.f32 %v298, %v362
    %v427 = vadd.f32 %v299, %v363
    %v428 = vadd.f32 %v300, %v364
    %v429 = vadd.f32 %v301, %v365
    %v430 = vadd.f32 %v302, %v366
    %v431 = vadd.f32 %v303, %v367
    %v432 = vadd.f32 %v304, %v368
    %v433 = vadd.f32 %v305, %v369
    %v434 = vadd.f32 %v306, %v370
    %v435 = vadd.f32 %v307, %v371
    %v436 = vadd.f32 %v308, %v372
    %v437 = vadd.f32 %v309, %v373
    %v438 = vadd.f32 %v310, %v374
    %439 = vst [vmem:[#allocation8] sm:$0xff] %v375
    %440 = vst [vmem:[#allocation8 + $0x8] sm:$0xff] %v376
    %441 = vst [vmem:[#allocation8 + $0x10] sm:$0xff] %v377
    %442 = vst [vmem:[#allocation8 + $0x18] sm:$0xff] %v378
    %443 = vst [vmem:[#allocation8 + $0x20] sm:$0xff] %v379
    %444 = vst [vmem:[#allocation8 + $0x28] sm:$0xff] %v380
    %445 = vst [vmem:[#allocation8 + $0x30] sm:$0xff] %v381
    %446 = vst [vmem:[#allocation8 + $0x38] sm:$0xff] %v382
    %447 = vst [vmem:[#allocation8 + $0x40] sm:$0xff] %v383
    %448 = vst [vmem:[#allocation8 + $0x48] sm:$0xff] %v384
    %449 = vst [vmem:[#allocation8 + $0x50] sm:$0xff] %v385
    %450 = vst [vmem:[#allocation8 + $0x58] sm:$0xff] %v386
    %451 = vst [vmem:[#allocation8 + $0x60] sm:$0xff] %v387
    %452 = vst [vmem:[#allocation8 + $0x68] sm:$0xff] %v388
    %453 = vst [vmem:[#allocation8 + $0x70] sm:$0xff] %v389
    %454 = vst [vmem:[#allocation8 + $0x78] sm:$0xff] %v390
    %455 = vst [vmem:[#allocation8 + $0x80] sm:$0xff] %v391
    %456 = vst [vmem:[#allocation8 + $0x88] sm:$0xff] %v392
    %457 = vst [vmem:[#allocation8 + $0x90] sm:$0xff] %v393
    %458 = vst [vmem:[#allocation8 + $0x98] sm:$0xff] %v394
    %459 = vst [vmem:[#allocation8 + $0xa0] sm:$0xff] %v395
    %460 = vst [vmem:[#allocation8 + $0xa8] sm:$0xff] %v396
    %461 = vst [vmem:[#allocation8 + $0xb0] sm:$0xff] %v397
    %462 = vst [vmem:[#allocation8 + $0xb8] sm:$0xff] %v398
    %463 = vst [vmem:[#allocation8 + $0xc0] sm:$0xff] %v399
    %464 = vst [vmem:[#allocation8 + $0xc8] sm:$0xff] %v400
    %465 = vst [vmem:[#allocation8 + $0xd0] sm:$0xff] %v401
    %466 = vst [vmem:[#allocation8 + $0xd8] sm:$0xff] %v402
    %467 = vst [vmem:[#allocation8 + $0xe0] sm:$0xff] %v403
    %468 = vst [vmem:[#allocation8 + $0xe8] sm:$0xff] %v404
    %469 = vst [vmem:[#allocation8 + $0xf0] sm:$0xff] %v405
    %470 = vst [vmem:[#allocation8 + $0xf8] sm:$0xff] %v406
    %471 = vst [vmem:[#allocation8 + $0x100] sm:$0xff] %v407
    %472 = vst [vmem:[#allocation8 + $0x108] sm:$0xff] %v408
    %473 = vst [vmem:[#allocation8 + $0x110] sm:$0xff] %v409
    %474 = vst [vmem:[#allocation8 + $0x118] sm:$0xff] %v410
    %475 = vst [vmem:[#allocation8 + $0x120] sm:$0xff] %v411
    %476 = vst [vmem:[#allocation8 + $0x128] sm:$0xff] %v412
    %477 = vst [vmem:[#allocation8 + $0x130] sm:$0xff] %v413
    %478 = vst [vmem:[#allocation8 + $0x138] sm:$0xff] %v414
    %479 = vst [vmem:[#allocation8 + $0x140] sm:$0xff] %v415
    %480 = vst [vmem:[#allocation8 + $0x148] sm:$0xff] %v416
    %481 = vst [vmem:[#allocation8 + $0x150] sm:$0xff] %v417
    %482 = vst [vmem:[#allocation8 + $0x158] sm:$0xff] %v418
    %483 = vst [vmem:[#allocation8 + $0x160] sm:$0xff] %v419
    %484 = vst [vmem:[#allocation8 + $0x168] sm:$0xff] %v420
    %485 = vst [vmem:[#allocation8 + $0x170] sm:$0xff] %v421
    %486 = vst [vmem:[#allocation8 + $0x178] sm:$0xff] %v422
    %487 = vst [vmem:[#allocation8 + $0x180] sm:$0xff] %v423
    %488 = vst [vmem:[#allocation8 + $0x188] sm:$0xff] %v424
    %489 = vst [vmem:[#allocation8 + $0x190] sm:$0xff] %v425
    %490 = vst [vmem:[#allocation8 + $0x198] sm:$0xff] %v426
    %491 = vst [vmem:[#allocation8 + $0x1a0] sm:$0xff] %v427
    %492 = vst [vmem:[#allocation8 + $0x1a8] sm:$0xff] %v428
    %493 = vst [vmem:[#allocation8 + $0x1b0] sm:$0xff] %v429
    %494 = vst [vmem:[#allocation8 + $0x1b8] sm:$0xff] %v430
    %495 = vst [vmem:[#allocation8 + $0x1c0] sm:$0xff] %v431
    %496 = vst [vmem:[#allocation8 + $0x1c8] sm:$0xff] %v432
    %497 = vst [vmem:[#allocation8 + $0x1d0] sm:$0xff] %v433
    %498 = vst [vmem:[#allocation8 + $0x1d8] sm:$0xff] %v434
    %499 = vst [vmem:[#allocation8 + $0x1e0] sm:$0xff] %v435
    %500 = vst [vmem:[#allocation8 + $0x1e8] sm:$0xff] %v436
    %501 = vst [vmem:[#allocation8 + $0x1f0] sm:$0xff] %v437
    %502 = vst [vmem:[#allocation8 + $0x1f8] sm:$0xff] %v438
    // Predicated region
    $region22: #{tpu_custom_call.1} parent=1 // pred_check
      _
    $region23: #{tpu_custom_call.1} parent=1 // pred_check_branch
      %504 = sbr.rel (0) target = $region25
    $region24: #{tpu_custom_call.1} parent=1 // pred_region
      %s506 = ssub.s32 8192, 8192
      %507 = vsyncadd [#allocation5], %s506
      %s508 = sshll.u32 [#allocation8], 4
      %s509 = int_to_ptr.vmem [resolvable:$true] %s508
      %514 = dma.vmem_to_hbm [thread:$0]  %s509, 8192, %s2, [#allocation5], 256, 256, 16
    $region25: #{tpu_custom_call.1} parent=1 // pred_fallthru
      _
    // Predicated region
    $region26: #{tpu_custom_call.1} parent=1 // pred_check
      _
    $region27: #{tpu_custom_call.1} parent=1 // pred_check_branch
      %516 = sbr.rel (0) target = $region29
    $region28: #{tpu_custom_call.1} parent=1 // pred_region
      %517 = dma.done [#allocation5], 8192
    $region29: #{tpu_custom_call.1} parent=1 // pred_fallthru
      _
    %518 = vsyncpa [#allocation4], 1
    %519 = vsyncpa [#allocation7], 1
    %520 = vsyncpa [#allocation5], 1

</llo_original>
